<compile_context>
chip_gen: v7x
topology: tpu7x:2x2x1
jax: 0.10.0
libtpu: 0.0.40
codegen_flags: <defaults>
</compile_context>

<pallas_src>
import jax
import jax.numpy as jnp
from jax.experimental import pallas as pl
from jax.experimental.pallas import tpu as pltpu

_MAX_DMA_CHUNKS = 4          # max concurrent HBM->HBM DMAs per call
_MIN_CHUNK_BYTES = 1 << 20   # don't split copies below ~1 MiB per chunk


def _make_identity_dma_kernel(chunks):
    """Build the Identity kernel for a fixed, static chunking of the leading axis.

    `chunks` is a tuple of (row_start, row_count) Python ints.  The kernel body
    issues one HBM->HBM DMA per chunk (own DMA semaphore each) and then waits
    for all of them.  No VMEM is touched and there is no grid.
    """
    n_chunks = len(chunks)

    def kernel(x_hbm, o_hbm, sem):
        if n_chunks == 1:
            # Whole-array copy: no slicing needed (most robust descriptor).
            copies = [pltpu.make_async_copy(x_hbm, o_hbm, sem.at[0])]
        else:
            copies = [
                pltpu.make_async_copy(
                    x_hbm.at[pl.ds(start, size)],
                    o_hbm.at[pl.ds(start, size)],
                    sem.at[k],
                )
                for k, (start, size) in enumerate(chunks)
            ]
        for cp in copies:   # issue every DMA back-to-back ...
            cp.start()
        for cp in copies:   # ... then wait for all of them to land.
            cp.wait()

    return kernel


def identity(x: jax.Array, *, donate: bool = False) -> jax.Array:
    """Pallas implementation of Identity.forward (y = x).

    donate=True : caller donates/owns `x`; Identity is a true no-op (zero HBM
                  traffic) -- hand the same buffer back.
    donate=False: produce a fresh buffer via a single-pass HBM->HBM DMA copy,
                  the roofline for a copy-producing Identity.
    """
    if donate or x.size == 0:
        return x

    orig_shape = x.shape
    xk = x.reshape(1) if x.ndim == 0 else x   # 0-d scalar: give the DMA a 1-d view

    rows = xk.shape[0]
    nbytes = xk.size * xk.dtype.itemsize
    n_chunks = max(1, min(_MAX_DMA_CHUNKS, rows, nbytes // _MIN_CHUNK_BYTES))

    # Static, as-even-as-possible split of the leading axis.
    base, rem = divmod(rows, n_chunks)
    chunks, start = [], 0
    for k in range(n_chunks):
        size = base + (1 if k < rem else 0)
        chunks.append((start, size))
        start += size

    out = pl.pallas_call(
        _make_identity_dma_kernel(tuple(chunks)),
        out_shape=jax.ShapeDtypeStruct(xk.shape, xk.dtype),
        in_specs=[pl.BlockSpec(memory_space=pl.ANY)],    # raw HBM ref, no auto-DMA
        out_specs=pl.BlockSpec(memory_space=pl.ANY),     # raw HBM ref, DMA'd manually
        scratch_shapes=[pltpu.SemaphoreType.DMA((n_chunks,))],
    )(xk)

    return out.reshape(orig_shape) if out.shape != orig_shape else out


if __name__ == "__main__":
    key = jax.random.PRNGKey(0)
    k0, k1, k2, k3 = jax.random.split(key, 4)

    # Small NCHW tensor (typical feature map being "bypassed" in transfer learning).
    x = jax.random.normal(k0, (2, 4, 16, 16), dtype=jnp.float32)
    y = identity(x)
    jax.block_until_ready(y)
    assert y.shape == x.shape and y.dtype == x.dtype
    assert bool(jnp.all(y == x)), "Identity mismatch (f32, single-DMA path)"

    # Odd element count / odd shape: copied untouched (no lane padding, no masking).
    x_odd = jax.random.normal(k1, (2, 3, 5, 7), dtype=jnp.float32)
    y_odd = identity(x_odd)
    jax.block_until_ready(y_odd)
    assert y_odd.shape == x_odd.shape and bool(jnp.all(y_odd == x_odd)), \
        "Identity mismatch (odd shape)"

    # Sub-32-bit dtype: the DMA is byte-exact regardless of packing.
    x_bf16 = jax.random.normal(k2, (2, 4, 16, 16)).astype(jnp.bfloat16)
    y_bf16 = identity(x_bf16)
    jax.block_until_ready(y_bf16)
    assert y_bf16.dtype == jnp.bfloat16 and bool(jnp.all(y_bf16 == x_bf16)), \
        "Identity mismatch (bf16)"

    # 4 MiB tensor: exercises the chunked path (4 concurrent ~1 MiB DMAs).
    x_big = jax.random.normal(k3, (8, 256, 512), dtype=jnp.float32)
    y_big = identity(x_big)
    jax.block_until_ready(y_big)
    assert y_big.shape == x_big.shape and bool(jnp.all(y_big == x_big)), \
        "Identity mismatch (chunked-DMA path)"

    # Donated input: true no-op (same buffer back, zero HBM traffic).
    assert identity(x, donate=True) is x

    print("KERNEL_OK")
</pallas_src>

<mosaic_0001>
module attributes {stable_mosaic.version = 11 : i64} {
  func.func @kernel(%arg0: memref<2x4x16x16xf32, #tpu.memory_space<any>>, %arg1: memref<2x4x16x16xf32, #tpu.memory_space<any>>, %arg2: memref<1x!tpu.dma_semaphore, #tpu.memory_space<semaphore_mem>>) attributes {dimension_semantics = [], scalar_prefetch = 0 : i64, scratch_operands = 1 : i64, tpu.core_type = #tpu.core_type<tc>} {
    %c0_i32 = arith.constant 0 : i32
    %0 = tpu.memref_slice %arg2[%c0_i32] : memref<1x!tpu.dma_semaphore, #tpu.memory_space<semaphore_mem>> -> memref<1x!tpu.dma_semaphore, #tpu.memory_space<semaphore_mem>>
    %1 = tpu.memref_squeeze %0 : memref<1x!tpu.dma_semaphore, #tpu.memory_space<semaphore_mem>> -> memref<!tpu.dma_semaphore, #tpu.memory_space<semaphore_mem>>
    tpu.enqueue_dma source(%arg0 : memref<2x4x16x16xf32, #tpu.memory_space<any>>) target(%arg1 : memref<2x4x16x16xf32, #tpu.memory_space<any>>) target_semaphore(%1 : memref<!tpu.dma_semaphore, #tpu.memory_space<semaphore_mem>>)
    %c0_i32_0 = arith.constant 0 : i32
    %2 = tpu.memref_slice %arg2[%c0_i32_0] : memref<1x!tpu.dma_semaphore, #tpu.memory_space<semaphore_mem>> -> memref<1x!tpu.dma_semaphore, #tpu.memory_space<semaphore_mem>>
    %3 = tpu.memref_squeeze %2 : memref<1x!tpu.dma_semaphore, #tpu.memory_space<semaphore_mem>> -> memref<!tpu.dma_semaphore, #tpu.memory_space<semaphore_mem>>
    tpu.wait_dma2 semaphore(%3 : memref<!tpu.dma_semaphore, #tpu.memory_space<semaphore_mem>>) src(%arg0 : memref<2x4x16x16xf32, #tpu.memory_space<any>>) dst(%arg1 : memref<2x4x16x16xf32, #tpu.memory_space<any>>)
    return
  }
}

</mosaic_0001>

<llo_original>
// kernel: tpu_custom_call.1
$region0: #{tpu_custom_call.1}
  #allocation0 [shape = 'u32[]', space=smem, size = 0x4, offset = 0x4, fixed_abs, tag = 'smem constant byte address 0x4 - core index']
  #allocation1 [shape = 'u32[144,128]{1,0:T(1,128)}', space=vmem, size = 0x12000, scoped, tag = 'internal scratch']
  #allocation2 [shape = 's32[1]{0}', space=sflag, size = 0x4, scoped, tag = 'scratch operand']
  #allocation3 [shape = 's32[]', space=sflag, size = 0x4, offset = 0, fixed_abs, tag = 'sflag constant byte address 0x0 - dummy sync flag']
  #allocation4 [shape = 'u32[0]{0}', space=smem, size = 0, offset = 0, fixed_abs, tag = 'smem constant byte address 0x0 - null']
  %s0 = inlined_call_operand.hbm [shape: f32[2,4,16,16], index: 0, kind: input, shape index: {}]
  %s1 = inlined_call_operand.hbm [shape: f32[2,4,16,16], index: 1, kind: output, shape index: {}]
  %s2 = sld [smem:[#allocation0]]
  $region2: #{tpu_custom_call.1} parent=0
    _
  %s4 = ssub.s32 1, %s2
  %s5 = scalar_select 0, %s4, %s2
  %s7 = sshll.u32 1, 14
  %s8 = sxor.u32 4294967295, %s7
  %s11 = sshll.u32 3, 24
  %s12 = sxor.u32 4294967295, %s11
  %s13 = sand.u32 0, %s12
  %s15 = sor.u32 %s13, 0
  %18 = dma.general %s0, 2048, %s1, [#allocation2], [#allocation3], [#allocation4], %s15, 0
  %s19 = smul.u32 2, 4
  %s20 = smul.u32 %s19, 16
  %s21 = smul.u32 %s20, 1
  %s22 = sshll.u32 %s21, 4
  %23 = dma.done [#allocation2], %s22
  %24 = vsyncmov [#allocation2]
  %s25 = vpop.sfrf %24
  %p26 = scmp.eq.s32.totalorder %s25, 0
  %p27 = pneg %p26
  %29 = shalt.err (%p27)

</llo_original>
